<compile_context>
chip_gen: v5e
topology: v5e:2x2
jax: 0.10.0
libtpu: 0.0.40
codegen_flags: <defaults>
</compile_context>

<pallas_src>
import functools
import math

import jax
import jax.numpy as jnp
from jax import lax
from jax.experimental import pallas as pl
from jax.experimental.pallas import tpu as pltpu


def make_pe_table(d_model: int, max_len: int = 5000) -> jnp.ndarray:
    """Sinusoidal table identical to the PyTorch __init__ ([max_len, 1, d_model])."""
    position = jnp.arange(max_len, dtype=jnp.float32)[:, None]
    div_term = jnp.exp(
        jnp.arange(0, d_model, 2, dtype=jnp.float32)
        * (-math.log(10000.0) / d_model)
    )
    pe = jnp.zeros((max_len, 1, d_model), dtype=jnp.float32)
    pe = pe.at[:, 0, 0::2].set(jnp.sin(position * div_term))
    pe = pe.at[:, 0, 1::2].set(jnp.cos(position * div_term[: d_model // 2]))
    return pe


def _round_up(x: int, m: int) -> int:
    return ((x + m - 1) // m) * m


def _posenc_kernel_aligned(x_ref, pe_ref, o_ref, *, nb: int, d_model: int):
    # x_ref/o_ref: (tile_s, nb*d_model) lane-dense block; pe_ref: (tile_s, d_model).
    # d_model % 128 == 0 -> every batch slice is a lane-aligned, unmasked store.
    if nb <= 8:
        # Small batch: static unroll, static (zero-cost) lane-slice views.
        for b in range(nb):
            sl = slice(b * d_model, (b + 1) * d_model)
            o_ref[:, sl] = x_ref[:, sl] + pe_ref[...]
    else:
        # Large batch: bounded-unroll loop; re-read pe_ref each iteration so no
        # (tile_s, d_model) value stays live across the whole unroll (avoids spills).
        def body(b, carry):
            start = pl.multiple_of(b * d_model, 128)
            o_ref[:, pl.ds(start, d_model)] = (
                x_ref[:, pl.ds(start, d_model)] + pe_ref[...]
            )
            return carry

        lax.fori_loop(0, nb, body, 0, unroll=4)


def _posenc_kernel_plain(x_ref, pe_ref, o_ref):
    # Fallback path: pe was pre-broadcast to the same (tile_s, bd) slab.
    o_ref[...] = x_ref[...] + pe_ref[...]


def positional_encoding_forward(
    x: jnp.ndarray, pe: jnp.ndarray, *, donate_x: bool = False
) -> jnp.ndarray:
    """x: [seq_len, batch, d_model]; pe: [max_len, 1, d_model] -> x + pe[:seq_len]."""
    seq_len, batch, d_model = x.shape
    bd = batch * d_model
    itemsize = jnp.dtype(x.dtype).itemsize
    # Native sublane packing per dtype width (f32:8, bf16:16, int8/fp8:32).
    sub = {4: 8, 2: 16, 1: 32}.get(itemsize, 8)

    # --- per-generation VMEM budget / block-byte target -----------------------
    try:
        vmem_cap = int(pltpu.get_tpu_info().vmem_capacity_bytes)
    except Exception:  # pragma: no cover - fall back to the smallest (v7x/TC) size
        vmem_cap = 64 * 1024 * 1024
    vmem_budget = vmem_cap // 2                       # never ask for > half physical
    slack = 2 * 1024 * 1024
    # ~4 x/out buffers + pe double-buffer per step -> divide the budget by ~5,
    # clamp to the measured 4-8 MiB sweet spot (>=1 MiB floor for tiny budgets).
    target_block_bytes = max(
        1 * 1024 * 1024, min(8 * 1024 * 1024, (vmem_budget - slack) // 5)
    )

    aligned = (d_model % 128 == 0)

    # Glue outside the kernel: fold minor dims into the lane axis (free) and
    # slice/cast pe once.
    x2 = x.reshape(seq_len, bd)
    pe_rows = pe[:seq_len, 0, :].astype(x.dtype)      # (seq_len, d_model)

    # --- lane (batch-chunk) tiling: aligned path only --------------------------
    if aligned:
        if sub * bd * itemsize > target_block_bytes and batch > 1:
            # Even an 8/16/32-row full-width block blows the target: split the
            # folded lane axis in multiples of d_model (keeps pe indexing trivial
            # and every chunk 128-aligned), giving v7x extra parallel tiles.
            max_b = max(1, target_block_bytes // (sub * d_model * itemsize))
            b_chunk = min(batch, max_b)
        else:
            b_chunk = batch
        tile_bd = b_chunk * d_model
        n_lane = pl.cdiv(bd, tile_bd)
        pe_width = d_model
    else:
        # Unaligned / small d_model: pre-broadcast pe so stores stay unmasked.
        # (Lane tiling skipped here; unaligned d_model is the small-model case.)
        tile_bd = bd
        n_lane = 1
        pe_width = bd

    # --- seq (sublane) tiling ---------------------------------------------------
    row_bytes = tile_bd * itemsize
    rows_from_bytes = max(sub, (target_block_bytes // max(row_bytes, 1)) // sub * sub)
    # Keep >= ~4 seq tiles so v7x's two TensorCores both get work.
    rows_for_4tiles = max(sub, _round_up(pl.cdiv(seq_len, 4), sub))
    tile_s = min(rows_from_bytes, rows_for_4tiles)
    if tile_s >= seq_len:
        tile_s = seq_len                              # full-dim block is always legal
    n_seq = pl.cdiv(seq_len, tile_s)

    # --- VMEM limit: double-buffered x-in + out + pe, plus slack ----------------
    x_block_bytes = tile_s * tile_bd * itemsize
    pe_block_bytes = tile_s * pe_width * itemsize
    vmem_limit = 4 * x_block_bytes + 2 * pe_block_bytes + slack
    vmem_limit = max(vmem_limit, 16 * 1024 * 1024)
    vmem_limit = min(vmem_limit, vmem_budget)

    # --- specs / kernel per path -------------------------------------------------
    if aligned:
        grid = (n_seq, n_lane)
        in_specs = [
            pl.BlockSpec((tile_s, tile_bd), lambda i, j: (i, j)),
            pl.BlockSpec((tile_s, d_model), lambda i, j: (i, 0)),
        ]
        out_specs = pl.BlockSpec((tile_s, tile_bd), lambda i, j: (i, j))
        kernel = functools.partial(
            _posenc_kernel_aligned, nb=tile_bd // d_model, d_model=d_model
        )
        pe_arg = pe_rows
        dim_sem = ("parallel", "parallel")
    else:
        pe_full = jnp.broadcast_to(
            pe_rows[:, None, :], (seq_len, batch, d_model)
        ).reshape(seq_len, bd)
        grid = (n_seq,)
        in_specs = [
            pl.BlockSpec((tile_s, bd), lambda i: (i, 0)),
            pl.BlockSpec((tile_s, bd), lambda i: (i, 0)),
        ]
        out_specs = pl.BlockSpec((tile_s, bd), lambda i: (i, 0))
        kernel = _posenc_kernel_plain
        pe_arg = pe_full
        dim_sem = ("parallel",)

    out2 = pl.pallas_call(
        kernel,
        out_shape=jax.ShapeDtypeStruct((seq_len, bd), x.dtype),
        grid=grid,
        in_specs=in_specs,
        out_specs=out_specs,
        compiler_params=pltpu.CompilerParams(
            dimension_semantics=dim_sem,
            vmem_limit_bytes=int(vmem_limit),
        ),
        cost_estimate=pl.CostEstimate(
            flops=seq_len * bd,
            transcendentals=0,
            bytes_accessed=(2 * seq_len * bd + seq_len * pe_width) * itemsize,
        ),
        input_output_aliases=({0: 0} if donate_x else {}),
    )(x2, pe_arg)

    return out2.reshape(seq_len, batch, d_model)


if __name__ == "__main__":
    key = jax.random.PRNGKey(0)

    # Test 1: module-like small shape (d_model=32 -> unaligned fallback path).
    d_model, max_len, seq_len, batch = 32, 64, 8, 2
    k1, k2 = jax.random.split(key)
    x = jax.random.normal(k1, (seq_len, batch, d_model), dtype=jnp.float32)
    pe = make_pe_table(d_model, max_len)
    out = jax.block_until_ready(positional_encoding_forward(x, pe))
    ref = x + pe[:seq_len]
    assert out.shape == x.shape
    assert jnp.allclose(out, ref, atol=1e-6), "mismatch vs reference (fallback path)"

    # Test 2: lane-aligned d_model=128 -> aligned fast path (in-kernel batch bcast).
    d_model2, seq_len2, batch2 = 128, 16, 2
    x2 = jax.random.normal(k2, (seq_len2, batch2, d_model2), dtype=jnp.float32)
    pe2 = make_pe_table(d_model2, 64)
    out2 = jax.block_until_ready(positional_encoding_forward(x2, pe2))
    ref2 = x2 + pe2[:seq_len2]
    assert out2.shape == x2.shape
    assert jnp.allclose(out2, ref2, atol=1e-6), "mismatch vs reference (aligned path)"

    print("KERNEL_OK")
</pallas_src>

<mosaic_0001>
module attributes {stable_mosaic.version = 11 : i64} {
  func.func @_posenc_kernel_plain(%arg0: i32, %arg1: memref<8x64xf32, #tpu.memory_space<vmem>>, %arg2: memref<8x64xf32, #tpu.memory_space<vmem>>, %arg3: memref<8x64xf32, #tpu.memory_space<vmem>>) attributes {dimension_semantics = [#tpu.dimension_semantics<parallel>], iteration_bounds = array<i64: 1>, scalar_prefetch = 0 : i64, scratch_operands = 0 : i64, tpu.core_type = #tpu.core_type<tc>, window_params = [{transform_indices = @transform_0, window_bounds = array<i64: 8, 64>}, {transform_indices = @transform_1, window_bounds = array<i64: 8, 64>}, {transform_indices = @transform_2, window_bounds = array<i64: 8, 64>}]} {
    %c0 = arith.constant 0 : index
    %c0_0 = arith.constant 0 : index
    %0 = vector.load %arg1[%c0, %c0_0] : memref<8x64xf32, #tpu.memory_space<vmem>>, vector<8x64xf32>
    %c0_1 = arith.constant 0 : index
    %c0_2 = arith.constant 0 : index
    %1 = vector.load %arg2[%c0_1, %c0_2] : memref<8x64xf32, #tpu.memory_space<vmem>>, vector<8x64xf32>
    %2 = arith.addf %0, %1 : vector<8x64xf32>
    %c0_3 = arith.constant 0 : index
    %c0_4 = arith.constant 0 : index
    %3 = vector.load %arg3[%c0_3, %c0_4] : memref<8x64xf32, #tpu.memory_space<vmem>>, vector<8x64xf32>
    tpu.vector_store %arg3[%c0_3, %c0_4], %2 {strides = array<i32>} : memref<8x64xf32, #tpu.memory_space<vmem>>, vector<8x64xf32>,
    return
  }
  func.func @transform_0(%arg0: i32) -> (i32, i32) {
    %c0_i32 = arith.constant 0 : i32
    %c0_i32_0 = arith.constant 0 : i32
    return %arg0, %c0_i32 : i32, i32
  }
  func.func @transform_1(%arg0: i32) -> (i32, i32) {
    %c0_i32 = arith.constant 0 : i32
    %c0_i32_0 = arith.constant 0 : i32
    return %arg0, %c0_i32 : i32, i32
  }
  func.func @transform_2(%arg0: i32) -> (i32, i32) {
    %c0_i32 = arith.constant 0 : i32
    %c0_i32_0 = arith.constant 0 : i32
    return %arg0, %c0_i32 : i32, i32
  }
}

</mosaic_0001>

<llo_original>
// kernel: tpu_custom_call.1
$region0: #{tpu_custom_call.1}
  #allocation0 [shape = 'u32[]', space=smem, size = 0x4, offset = 0x4, fixed_abs, tag = 'smem constant byte address 0x4 - core index']
  #allocation1 [shape = 'u32[72,128]{1,0:T(1,128)}', space=vmem, size = 0x9000, scoped, tag = 'internal scratch']
  %s0 = inlined_call_operand.hbm [shape: f32[8,64], index: 0, kind: input, shape index: {}]
  %s1 = inlined_call_operand.hbm [shape: f32[8,64], index: 1, kind: input, shape index: {}]
  %s2 = inlined_call_operand.hbm [shape: f32[8,64], index: 2, kind: output, shape index: {}]
  %s3 = sld [smem:[#allocation0]]
  $region26: #{tpu_custom_call.1} parent=0
    _
  %s5 = ssub.s32 1, %s3
  %s6 = scalar_select 0, %s5, %s3
  $region1: #{tpu_custom_call.1} parent=0
    #allocation2 [shape = 'u8[4096]{0}', space=vmem, size = 0x1000, scoped, tag = 'input window, operand 0, single buffered']
    #allocation3 [shape = 's32[1]{0}', space=sflag, size = 0x4, scoped, tag = 'scoped memory for tpu_custom_call.1']
    #allocation4 [shape = 's32[1]{0}', space=sflag, size = 0x4, scoped, tag = 'scoped memory for tpu_custom_call.1']
    #allocation5 [shape = 'u8[4096]{0}', space=vmem, size = 0x1000, scoped, tag = 'input window, operand 1, single buffered']
    #allocation6 [shape = 's32[1]{0}', space=sflag, size = 0x4, scoped, tag = 'scoped memory for tpu_custom_call.1']
    #allocation7 [shape = 'u8[4096]{0}', space=vmem, size = 0x1000, scoped, tag = 'output window, operand 0, single buffered']
    %7 = vsyncpa [#allocation3], 0
    %8 = vsyncpa [#allocation6], 0
    %9 = vsyncpa [#allocation4], 0
    // Predicated region
    $region2: #{tpu_custom_call.1} parent=1 // pred_check
      _
    $region3: #{tpu_custom_call.1} parent=1 // pred_check_branch
      %11 = sbr.rel (0) target = $region5
    $region4: #{tpu_custom_call.1} parent=1 // pred_region
      %13 = vsyncadd [#allocation3], 0
      %s15 = sshll.u32 %s0, 4
      %s16 = int_to_ptr.hbm [resolvable:$true] %s15
      %s17 = sshll.u32 [#allocation2], 4
      %s18 = int_to_ptr.vmem [resolvable:$true] %s17
      %20 = dma.hbm_to_vmem [thread:$0]  %s16, 128, %s18, [#allocation3]
    $region5: #{tpu_custom_call.1} parent=1 // pred_fallthru
      _
    // Predicated region
    $region6: #{tpu_custom_call.1} parent=1 // pred_check
      _
    $region7: #{tpu_custom_call.1} parent=1 // pred_check_branch
      %22 = sbr.rel (0) target = $region9
    $region8: #{tpu_custom_call.1} parent=1 // pred_region
      %24 = vsyncadd [#allocation6], 0
      %s26 = sshll.u32 %s1, 4
      %s27 = int_to_ptr.hbm [resolvable:$true] %s26
      %s28 = sshll.u32 [#allocation5], 4
      %s29 = int_to_ptr.vmem [resolvable:$true] %s28
      %31 = dma.hbm_to_vmem [thread:$0]  %s27, 128, %s29, [#allocation6]
    $region9: #{tpu_custom_call.1} parent=1 // pred_fallthru
      _
    // Predicated region
    $region10: #{tpu_custom_call.1} parent=1 // pred_check
      _
    $region11: #{tpu_custom_call.1} parent=1 // pred_check_branch
      %33 = sbr.rel (0) target = $region13
    $region12: #{tpu_custom_call.1} parent=1 // pred_region
      %35 = dma.done [#allocation3], 128
    $region13: #{tpu_custom_call.1} parent=1 // pred_fallthru
      _
    // Predicated region
    $region14: #{tpu_custom_call.1} parent=1 // pred_check
      _
    $region15: #{tpu_custom_call.1} parent=1 // pred_check_branch
      %37 = sbr.rel (0) target = $region17
    $region16: #{tpu_custom_call.1} parent=1 // pred_region
      %39 = dma.done [#allocation6], 128
    $region17: #{tpu_custom_call.1} parent=1 // pred_fallthru
      _
    %v40 = vld [vmem:[#allocation2] sm:$0xff]
    %v41 = vld [vmem:[#allocation5] sm:$0xff]
    %v42 = vadd.f32 %v40, %v41
    %vm43 = vcmask 523264
    %44 = vst.msk [vmem:[#allocation7] sm:$0xff] %vm43, %v42
    // Predicated region
    $region18: #{tpu_custom_call.1} parent=1 // pred_check
      _
    $region19: #{tpu_custom_call.1} parent=1 // pred_check_branch
      %46 = sbr.rel (0) target = $region21
    $region20: #{tpu_custom_call.1} parent=1 // pred_region
      %48 = vsyncadd [#allocation4], 0
      %s50 = sshll.u32 [#allocation7], 4
      %s51 = int_to_ptr.vmem [resolvable:$true] %s50
      %s52 = sshll.u32 %s2, 4
      %s53 = int_to_ptr.hbm [resolvable:$true] %s52
      %55 = dma.vmem_to_hbm [thread:$0]  %s51, 128, %s53, [#allocation4]
    $region21: #{tpu_custom_call.1} parent=1 // pred_fallthru
      _
    // Predicated region
    $region22: #{tpu_custom_call.1} parent=1 // pred_check
      _
    $region23: #{tpu_custom_call.1} parent=1 // pred_check_branch
      %57 = sbr.rel (0) target = $region25
    $region24: #{tpu_custom_call.1} parent=1 // pred_region
      %59 = dma.done [#allocation4], 128
    $region25: #{tpu_custom_call.1} parent=1 // pred_fallthru
      _
    %60 = vsyncpa [#allocation3], 1
    %61 = vsyncpa [#allocation6], 1
    %62 = vsyncpa [#allocation4], 1

</llo_original>
